<compile_context>
chip_gen: v7x
topology: tpu7x:2x2x1
jax: 0.10.0
libtpu: 0.0.40
codegen_flags: <defaults>
</compile_context>

<pallas_src>
import math

import jax
import jax.numpy as jnp
from jax import lax
from jax.experimental import pallas as pl
from jax.experimental.pallas import tpu as pltpu

_LANE = 128


# ---------------------- fused BatchNorm-affine + Mish ------------------------

def _bn_mish_kernel(x_ref, scale_ref, shift_ref, o_ref):
    # Per-row channel affine == BatchNorm normalize + affine (row = (n, c)).
    z = x_ref[...].astype(jnp.float32) * scale_ref[...] + shift_ref[...]
    # mish(z) = z * tanh(softplus(z));  with t = exp(min(z, 20)) (torch threshold)
    #   tanh(softplus(z)) = t*(t+2) / (t*(t+2) + 2)
    t = jnp.exp(jnp.minimum(z, 20.0))          # 1 EUP op
    u = t * (t + 2.0)                          # VPU
    d = u + 2.0
    r = pl.reciprocal(d, approx=True)          # 1 EUP op (vrcp)
    r = r * (2.0 - d * r)                      # one Newton-Raphson step (VPU)
    o_ref[...] = (z * (u * r)).astype(o_ref.dtype)


def _pick_tiles(rows, cols, itemsize, tile_bytes):
    sub = 8 * max(1, 4 // itemsize)            # sublane packing: 8 f32 / 16 bf16
    if cols % _LANE == 0:
        col_target = max(_LANE, (tile_bytes // (sub * itemsize)) // _LANE * _LANE)
        tc = min(cols, col_target)
    else:
        tc = cols                              # full-extent last dim (always legal)
    row_target = max(sub, (tile_bytes // (tc * itemsize)) // sub * sub)
    tr = min(row_target, (rows // sub) * sub) if rows >= sub else rows
    return tr, tc


def _scale_shift_mish_2d(x2d, scale_rows, shift_rows, *, tile_bytes):
    rows, cols = x2d.shape
    itemsize = jnp.dtype(x2d.dtype).itemsize
    tr, tc = _pick_tiles(rows, cols, itemsize, tile_bytes)
    grid = (pl.cdiv(rows, tr), pl.cdiv(cols, tc))
    n = rows * cols
    cost = pl.CostEstimate(
        flops=12 * n,
        transcendentals=2 * n,
        bytes_accessed=2 * n * itemsize + 2 * rows * 4,
    )
    return pl.pallas_call(
        _bn_mish_kernel,
        out_shape=jax.ShapeDtypeStruct(x2d.shape, x2d.dtype),
        grid_spec=pltpu.PrefetchScalarGridSpec(
            num_scalar_prefetch=0,
            grid=grid,
            in_specs=[
                pl.BlockSpec((tr, tc), lambda i, j: (i, j)),
                pl.BlockSpec((tr, 1), lambda i, j: (i, 0)),
                pl.BlockSpec((tr, 1), lambda i, j: (i, 0)),
            ],
            out_specs=pl.BlockSpec((tr, tc), lambda i, j: (i, j)),
        ),
        compiler_params=pltpu.CompilerParams(
            # TODO(synk): on v7x, confirm in a trace that both TensorCores are
            # driven; if only one is active, move the row axis to
            # pltpu.CORE_PARALLEL (v5e/v6e have a single TC, no-op there).
            dimension_semantics=("parallel", "parallel"),
            # 4 MiB tiles double-buffered in+out (~16 MiB) + headroom; under
            # v7x's 64 MiB physical VMEM, and load-bearing on v5e (16 MiB
            # scoped default).
            vmem_limit_bytes=48 * 1024 * 1024,
        ),
        cost_estimate=cost,
    )(x2d, scale_rows, shift_rows)


def bn_mish(y, gamma, beta, *, eps=1e-5, tile_bytes=4 << 20):
    """Fused BatchNorm2d (training-mode batch stats) + Mish, Pallas-backed."""
    N, C, H, W = y.shape
    if N * C * H * W == 0:
        return y
    # Per-channel batch statistics (biased var), done by XLA (tiny reductions).
    mean = jnp.mean(y, axis=(0, 2, 3), dtype=jnp.float32)
    var = jnp.mean(
        jnp.square(y.astype(jnp.float32) - mean[None, :, None, None]),
        axis=(0, 2, 3))
    scale = gamma.astype(jnp.float32) * lax.rsqrt(var + eps)
    shift = beta.astype(jnp.float32) - mean * scale

    rows, cols = N * C, H * W
    scale_rows = jnp.tile(scale, N).reshape(rows, 1)   # row n*C + c -> channel c
    shift_rows = jnp.tile(shift, N).reshape(rows, 1)
    out2d = _scale_shift_mish_2d(y.reshape(rows, cols), scale_rows, shift_rows,
                                 tile_bytes=tile_bytes)
    return out2d.reshape(y.shape)


# ----------------------------- pure-jnp reference ----------------------------

def _mish_ref(x):
    xf = x.astype(jnp.float32)
    sp = jnp.where(xf > 20.0, xf, jnp.log1p(jnp.exp(jnp.minimum(xf, 20.0))))
    return xf * jnp.tanh(sp)


def _bn_mish_ref(y, gamma, beta, eps=1e-5):
    yf = y.astype(jnp.float32)
    mean = jnp.mean(yf, axis=(0, 2, 3), keepdims=True)
    var = jnp.mean(jnp.square(yf - mean), axis=(0, 2, 3), keepdims=True)
    z = (yf - mean) * lax.rsqrt(var + eps) * gamma[None, :, None, None] \
        + beta[None, :, None, None]
    return _mish_ref(z).astype(y.dtype)


# ------------------------------- DensUnit in JAX ------------------------------
# TODO(synk): Conv2d and the BN batch-statistic reductions are left to XLA
# (lax.conv_general_dilated + per-channel means); only the memory-bound
# normalize/affine + Mish epilogue is the natural Pallas target here.

def autopad(k, p=None):
    if p is not None:
        return (p, p) if isinstance(p, int) else tuple(p)
    if isinstance(k, int):
        return (k // 2, k // 2)
    return tuple(kk // 2 for kk in k)


def conv2d(x, w, b, stride=(1, 1), padding=(0, 0)):
    y = lax.conv_general_dilated(
        x, w, window_strides=tuple(stride),
        padding=((padding[0], padding[0]), (padding[1], padding[1])),
        dimension_numbers=("NCHW", "OIHW", "NCHW"))
    return y + b[None, :, None, None]


def cba_forward(x, p, kernel, bn_act):
    if kernel == (1, 1):
        y = conv2d(x, p["C_w"], p["C_b"], padding=autopad((1, 1)))
        return bn_act(y, p["B_g"], p["B_b"])
    if kernel == (3, 3):
        # Faithful to the PyTorch spec: the (1,3)/(3,1) branches use
        # autopad(1) == 0, so their spatial dims differ from the (3,3) branch
        # and the concat fails exactly like the original module would.
        y33 = bn_act(conv2d(x, p["C33_w"], p["C33_b"], padding=autopad((3, 3))),
                     p["B33_g"], p["B33_b"])
        y13 = bn_act(conv2d(x, p["C13_w"], p["C13_b"], padding=autopad(1)),
                     p["B13_g"], p["B13_b"])
        y31 = bn_act(conv2d(x, p["C31_w"], p["C31_b"], padding=autopad(1)),
                     p["B31_g"], p["B31_b"])
        return jnp.concatenate([y33, y13, y31], axis=1)
    raise ValueError(f"unsupported kernel {kernel}")


def dens_unit_forward(x, params, kernels, bn_act):
    y = x
    for p, k in zip(params, kernels):
        y = cba_forward(y, p, k, bn_act)
    return jnp.concatenate([x, y], axis=1)


# -------------------------------- init helpers --------------------------------

def _init_conv(key, out_c, in_c, kh, kw):
    kw_key, kb_key = jax.random.split(key)
    bound = 1.0 / math.sqrt(in_c * kh * kw)
    w = jax.random.uniform(kw_key, (out_c, in_c, kh, kw), jnp.float32, -bound, bound)
    b = jax.random.uniform(kb_key, (out_c,), jnp.float32, -bound, bound)
    return w, b


def init_cba(key, in_c, out_c, kernel):
    if kernel == (1, 1):
        w, b = _init_conv(key, out_c, in_c, 1, 1)
        return {"C_w": w, "C_b": b,
                "B_g": jnp.ones((out_c,), jnp.float32),
                "B_b": jnp.zeros((out_c,), jnp.float32)}
    k1, k2, k3 = jax.random.split(key, 3)
    p = {}
    for name, kk, shp in (("33", k1, (3, 3)), ("13", k2, (1, 3)), ("31", k3, (3, 1))):
        w, b = _init_conv(kk, out_c, in_c, shp[0], shp[1])
        p[f"C{name}_w"], p[f"C{name}_b"] = w, b
        p[f"B{name}_g"] = jnp.ones((out_c,), jnp.float32)
        p[f"B{name}_b"] = jnp.zeros((out_c,), jnp.float32)
    return p


def init_dens_unit(key, in_c, out_channels, kernels):
    params, c = [], in_c
    for oc, k in zip(out_channels, kernels):
        key, sk = jax.random.split(key)
        params.append(init_cba(sk, c, oc, k))
        c = oc if k == (1, 1) else 3 * oc      # channels actually produced
    return params


# ------------------------------------ demo ------------------------------------

if __name__ == "__main__":
    key = jax.random.PRNGKey(0)
    kx, kp = jax.random.split(key)

    # DensUnit(act=Mish, in_channel=4, out_channels=(8, 4), kernels=((1,1),(1,1)))
    # (a (3,3) CBa inside DensUnit is not runnable with the spec's default
    #  autopad, so the demo uses the 1x1 configuration.)
    in_channel = 4
    out_channels = (8, 4)
    kernels = ((1, 1), (1, 1))

    x = jax.random.normal(kx, (2, in_channel, 16, 16), jnp.float32)
    params = init_dens_unit(kp, in_channel, out_channels, kernels)

    # Standalone check of the fused BN+Mish kernel (lane-dense and ragged-block
    # shapes; no full-tensor pad/concat anywhere).
    for shape in ((2, 8, 16, 16), (3, 5, 9, 11)):
        yt = jax.random.normal(jax.random.PRNGKey(1), shape, jnp.float32) * 3.0
        g = jnp.linspace(0.5, 1.5, shape[1]).astype(jnp.float32)
        b = jnp.linspace(-0.3, 0.3, shape[1]).astype(jnp.float32)
        got = jax.block_until_ready(bn_mish(yt, g, b))
        want = _bn_mish_ref(yt, g, b)
        assert got.shape == yt.shape and got.dtype == yt.dtype
        assert jnp.allclose(got, want, atol=1e-4, rtol=1e-4), "bn_mish mismatch"

    fwd = jax.jit(lambda xx: dens_unit_forward(xx, params, kernels, bn_mish))
    y = jax.block_until_ready(fwd(x))

    y_ref = dens_unit_forward(x, params, kernels, _bn_mish_ref)
    assert y.shape == (2, in_channel + out_channels[-1], 16, 16)
    assert y.dtype == x.dtype
    assert jnp.allclose(y, y_ref, atol=1e-4, rtol=1e-4), "DensUnit mismatch"

    print("KERNEL_OK")
</pallas_src>

<mosaic_0001>
module attributes {stable_mosaic.version = 11 : i64} {
  func.func @_bn_mish_kernel(%arg0: i32, %arg1: i32, %arg2: memref<16x256xf32, #tpu.memory_space<vmem>>, %arg3: memref<16x1xf32, #tpu.memory_space<vmem>>, %arg4: memref<16x1xf32, #tpu.memory_space<vmem>>, %arg5: memref<16x256xf32, #tpu.memory_space<vmem>>) attributes {dimension_semantics = [#tpu.dimension_semantics<parallel>, #tpu.dimension_semantics<parallel>], iteration_bounds = array<i64: 1, 1>, scalar_prefetch = 0 : i64, scratch_operands = 0 : i64, tpu.core_type = #tpu.core_type<tc>, window_params = [{transform_indices = @transform_0, window_bounds = array<i64: 16, 256>}, {transform_indices = @transform_1, window_bounds = array<i64: 16, 1>}, {transform_indices = @transform_2, window_bounds = array<i64: 16, 1>}, {transform_indices = @transform_3, window_bounds = array<i64: 16, 256>}]} {
    %c0 = arith.constant 0 : index
    %c0_0 = arith.constant 0 : index
    %0 = vector.load %arg2[%c0, %c0_0] : memref<16x256xf32, #tpu.memory_space<vmem>>, vector<16x256xf32>
    %c0_1 = arith.constant 0 : index
    %c0_2 = arith.constant 0 : index
    %1 = vector.load %arg3[%c0_1, %c0_2] : memref<16x1xf32, #tpu.memory_space<vmem>>, vector<16x1xf32>
    %2 = vector.broadcast %1 : vector<16x1xf32> to vector<16x256xf32>
    %3 = arith.mulf %0, %2 : vector<16x256xf32>
    %c0_3 = arith.constant 0 : index
    %c0_4 = arith.constant 0 : index
    %4 = vector.load %arg4[%c0_3, %c0_4] : memref<16x1xf32, #tpu.memory_space<vmem>>, vector<16x1xf32>
    %5 = vector.broadcast %4 : vector<16x1xf32> to vector<16x256xf32>
    %6 = arith.addf %3, %5 : vector<16x256xf32>
    %cst = arith.constant 2.000000e+01 : f32
    %7 = vector.broadcast %cst : f32 to vector<16x256xf32>
    %8 = arith.minimumf %6, %7 : vector<16x256xf32>
    %9 = math.exp %8 : vector<16x256xf32>
    %cst_5 = arith.constant 2.000000e+00 : f32
    %10 = vector.broadcast %cst_5 : f32 to vector<16x256xf32>
    %11 = arith.addf %9, %10 : vector<16x256xf32>
    %12 = arith.mulf %9, %11 : vector<16x256xf32>
    %cst_6 = arith.constant 2.000000e+00 : f32
    %13 = vector.broadcast %cst_6 : f32 to vector<16x256xf32>
    %14 = arith.addf %12, %13 : vector<16x256xf32>
    %15 = tpu.reciprocal %14 {approx = true} : vector<16x256xf32> -> vector<16x256xf32>
    %16 = arith.mulf %14, %15 : vector<16x256xf32>
    %cst_7 = arith.constant 2.000000e+00 : f32
    %17 = vector.broadcast %cst_7 : f32 to vector<16x256xf32>
    %18 = arith.subf %17, %16 : vector<16x256xf32>
    %19 = arith.mulf %15, %18 : vector<16x256xf32>
    %20 = arith.mulf %12, %19 : vector<16x256xf32>
    %21 = arith.mulf %6, %20 : vector<16x256xf32>
    %c0_8 = arith.constant 0 : index
    %c0_9 = arith.constant 0 : index
    %22 = vector.load %arg5[%c0_8, %c0_9] : memref<16x256xf32, #tpu.memory_space<vmem>>, vector<16x256xf32>
    tpu.vector_store %arg5[%c0_8, %c0_9], %21 {strides = array<i32>} : memref<16x256xf32, #tpu.memory_space<vmem>>, vector<16x256xf32>,
    return
  }
  func.func @transform_0(%arg0: i32, %arg1: i32) -> (i32, i32) {
    %c0_i32 = arith.constant 0 : i32
    return %arg0, %arg1 : i32, i32
  }
  func.func @transform_1(%arg0: i32, %arg1: i32) -> (i32, i32) {
    %c0_i32 = arith.constant 0 : i32
    %c0_i32_0 = arith.constant 0 : i32
    return %arg0, %c0_i32 : i32, i32
  }
  func.func @transform_2(%arg0: i32, %arg1: i32) -> (i32, i32) {
    %c0_i32 = arith.constant 0 : i32
    %c0_i32_0 = arith.constant 0 : i32
    return %arg0, %c0_i32 : i32, i32
  }
  func.func @transform_3(%arg0: i32, %arg1: i32) -> (i32, i32) {
    %c0_i32 = arith.constant 0 : i32
    return %arg0, %arg1 : i32, i32
  }
}

</mosaic_0001>

<llo_original>
// kernel: tpu_custom_call.1
$region0: #{tpu_custom_call.1}
  #allocation0 [shape = 'u32[]', space=smem, size = 0x4, offset = 0x4, fixed_abs, tag = 'smem constant byte address 0x4 - core index']
  #allocation1 [shape = 'u32[144,128]{1,0:T(1,128)}', space=vmem, size = 0x12000, scoped, tag = 'internal scratch']
  %s0 = inlined_call_operand.vmem [shape: f32[16,256], index: 0, kind: input, shape index: {}]
  %s1 = inlined_call_operand.vmem [shape: f32[16,1], index: 1, kind: input, shape index: {}]
  %s2 = inlined_call_operand.vmem [shape: f32[16,1], index: 2, kind: input, shape index: {}]
  %s3 = inlined_call_operand.hbm [shape: f32[16,256], index: 3, kind: output, shape index: {}]
  %s4 = sld [smem:[#allocation0]]
  $region22: #{tpu_custom_call.1} parent=0
    _
  %s6 = ssub.s32 1, %s4
  %s7 = scalar_select 0, %s6, %s4
  $region1: #{tpu_custom_call.1} parent=0
    #allocation2 [shape = 'u8[16384]{0}', space=vmem, size = 0x4000, scoped, tag = 'output window, operand 0, single buffered']
    #allocation3 [shape = 's32[1]{0}', space=sflag, size = 0x4, scoped, tag = 'scoped memory for tpu_custom_call.1']
    %8 = vsyncpa [#allocation3], 0
    // Predicated region
    $region2: #{tpu_custom_call.1} parent=1 // pred_check
      _
    $region3: #{tpu_custom_call.1} parent=1 // pred_check_branch
      %10 = sbr.rel (0) target = $region5
    $region4: #{tpu_custom_call.1} parent=1 // pred_region
      _
    $region5: #{tpu_custom_call.1} parent=1 // pred_fallthru
      _
    // Predicated region
    $region6: #{tpu_custom_call.1} parent=1 // pred_check
      _
    $region7: #{tpu_custom_call.1} parent=1 // pred_check_branch
      %12 = sbr.rel (0) target = $region9
    $region8: #{tpu_custom_call.1} parent=1 // pred_region
      _
    $region9: #{tpu_custom_call.1} parent=1 // pred_fallthru
      _
    // Predicated region
    $region10: #{tpu_custom_call.1} parent=1 // pred_check
      _
    $region11: #{tpu_custom_call.1} parent=1 // pred_check_branch
      %14 = sbr.rel (0) target = $region13
    $region12: #{tpu_custom_call.1} parent=1 // pred_region
      _
    $region13: #{tpu_custom_call.1} parent=1 // pred_fallthru
      _
    %v15 = vld [vmem:[%s0] sm:$0xff]
    %v16 = vld [vmem:[%s0 + $0x8] sm:$0xff]
    %v17 = vld [vmem:[%s0 + $0x10] sm:$0xff]
    %v18 = vld [vmem:[%s0 + $0x18] sm:$0xff]
    %v19 = vld [vmem:[%s1] sm:$0xff]
    %v20 = vld [vmem:[%s1 + $0x8] sm:$0xff]
    %22 = vset.pattern.permute.xlu0 0
    %23 = vperm.xlu0 %22, %v19
    %v24 = vpop.permute.xlu0 %23
    %27 = vset.pattern.permute.xlu0 0
    %28 = vperm.xlu0 %27, %v20
    %v29 = vpop.permute.xlu0 %28
    %v31 = vmul.f32 %v15, %v24
    %v32 = vmul.f32 %v16, %v24
    %v33 = vmul.f32 %v17, %v29
    %v34 = vmul.f32 %v18, %v29
    %v35 = vld [vmem:[%s2] sm:$0xff]
    %v36 = vld [vmem:[%s2 + $0x8] sm:$0xff]
    %38 = vset.pattern.permute.xlu0 0
    %39 = vperm.xlu0 %38, %v35
    %v40 = vpop.permute.xlu0 %39
    %43 = vset.pattern.permute.xlu0 0
    %44 = vperm.xlu0 %43, %v36
    %v45 = vpop.permute.xlu0 %44
    %v47 = vadd.f32 %v31, %v40
    %v48 = vadd.f32 %v32, %v40
    %v49 = vadd.f32 %v33, %v45
    %v50 = vadd.f32 %v34, %v45
    %v51 = vmin.f32 %v47, 20.0
    %v52 = vmin.f32 %v48, 20.0
    %v53 = vmin.f32 %v49, 20.0
    %v54 = vmin.f32 %v50, 20.0
    %v55 = vmul.f32 %v51, 1.442695
    %v56 = vpow.pop %v55
    %v57 = vmul.f32 %v52, 1.442695
    %v58 = vpow.pop %v57
    %v59 = vmul.f32 %v53, 1.442695
    %v60 = vpow.pop %v59
    %v61 = vmul.f32 %v54, 1.442695
    %v62 = vpow.pop %v61
    %v63 = vadd.f32 %v56, 2.0
    %v64 = vadd.f32 %v58, 2.0
    %v65 = vadd.f32 %v60, 2.0
    %v66 = vadd.f32 %v62, 2.0
    %v67 = vmul.f32 %v56, %v63
    %v68 = vmul.f32 %v58, %v64
    %v69 = vmul.f32 %v60, %v65
    %v70 = vmul.f32 %v62, %v66
    %v71 = vadd.f32 %v67, 2.0
    %v72 = vadd.f32 %v68, 2.0
    %v73 = vadd.f32 %v69, 2.0
    %v74 = vadd.f32 %v70, 2.0
    %v75 = vrcp.pop %v71
    %v76 = vrcp.pop %v72
    %v77 = vrcp.pop %v73
    %v78 = vrcp.pop %v74
    %v79 = vmul.f32 %v71, %v75
    %v80 = vmul.f32 %v72, %v76
    %v81 = vmul.f32 %v73, %v77
    %v82 = vmul.f32 %v74, %v78
    %v83 = vsub.f32 2.0, %v79
    %v84 = vsub.f32 2.0, %v80
    %v85 = vsub.f32 2.0, %v81
    %v86 = vsub.f32 2.0, %v82
    %v87 = vmul.f32 %v75, %v83
    %v88 = vmul.f32 %v76, %v84
    %v89 = vmul.f32 %v77, %v85
    %v90 = vmul.f32 %v78, %v86
    %v91 = vmul.f32 %v67, %v87
    %v92 = vmul.f32 %v68, %v88
    %v93 = vmul.f32 %v69, %v89
    %v94 = vmul.f32 %v70, %v90
    %v95 = vmul.f32 %v47, %v91
    %v96 = vmul.f32 %v48, %v92
    %v97 = vmul.f32 %v49, %v93
    %v98 = vmul.f32 %v50, %v94
    %99 = vst [vmem:[#allocation2] sm:$0xff] %v95
    %100 = vst [vmem:[#allocation2 + $0x8] sm:$0xff] %v96
    %101 = vst [vmem:[#allocation2 + $0x10] sm:$0xff] %v97
    %102 = vst [vmem:[#allocation2 + $0x18] sm:$0xff] %v98
    // Predicated region
    $region14: #{tpu_custom_call.1} parent=1 // pred_check
      _
    $region15: #{tpu_custom_call.1} parent=1 // pred_check_branch
      %104 = sbr.rel (0) target = $region17
    $region16: #{tpu_custom_call.1} parent=1 // pred_region
      %s106 = ssub.s32 512, 512
      %107 = vsyncadd [#allocation3], %s106
      %s108 = sshll.u32 [#allocation2], 4
      %s109 = int_to_ptr.vmem [resolvable:$true] %s108
      %114 = dma.vmem_to_hbm [thread:$0]  %s109, 512, %s3, [#allocation3], 256, 256, 16
    $region17: #{tpu_custom_call.1} parent=1 // pred_fallthru
      _
    // Predicated region
    $region18: #{tpu_custom_call.1} parent=1 // pred_check
      _
    $region19: #{tpu_custom_call.1} parent=1 // pred_check_branch
      %116 = sbr.rel (0) target = $region21
    $region20: #{tpu_custom_call.1} parent=1 // pred_region
      %117 = dma.done [#allocation3], 512
    $region21: #{tpu_custom_call.1} parent=1 // pred_fallthru
      _
    %118 = vsyncpa [#allocation3], 1

</llo_original>
